<compile_context>
chip_gen: v5e
topology: v5e:2x2
jax: 0.10.0
libtpu: 0.0.40
codegen_flags: <defaults>
</compile_context>

<pallas_src>
import jax
import jax.numpy as jnp
from jax.experimental import pallas as pl
from jax.experimental.pallas import tpu as pltpu


# ----------------------------- kernels --------------------------------------

def _logits_softmax(pooled_f32, w_ref, b_ref, o_ref):
    # pooled_f32: [TB, C]; w_ref: [C, NC] (1/S pre-folded); b_ref: [1, NC].
    # Rows are fully independent, so padded batch rows in a partial last tile
    # cannot contaminate valid rows (they are simply never written back).
    logits = jnp.dot(pooled_f32, w_ref[...],
                     preferred_element_type=jnp.float32) + b_ref[...]   # [TB, NC]
    m = jnp.max(logits, axis=-1, keepdims=True)
    e = jnp.exp(logits - m)
    o_ref[...] = (e / jnp.sum(e, axis=-1, keepdims=True)).astype(o_ref.dtype)


def _head_kernel_bsc(x_ref, w_ref, b_ref, o_ref):
    # Channels-last stream: x_ref [TB, S, C]. AdaptiveAvgPool2d(1)+Flatten ==
    # sum over spatial (1/S folded into w). f32 accumulation is fused into the
    # reduce; no full-tile f32 temporary is kept live.
    pooled = jnp.sum(x_ref[...], axis=1, dtype=jnp.float32)            # [TB, C]
    # Dropout(p=0.5): inference-time identity.
    _logits_softmax(pooled, w_ref, b_ref, o_ref)


def _head_kernel_bcs(x_ref, w_ref, b_ref, o_ref):
    # PyTorch-layout stream: x_ref [TB, C, S]. Reduce over the last (lane)
    # axis -> XLU, which is otherwise idle in this mem-bound kernel.
    pooled = jnp.sum(x_ref[...], axis=-1, dtype=jnp.float32)           # [TB, C]
    _logits_softmax(pooled, w_ref, b_ref, o_ref)


# --------------------------- VMEM / tile planning ---------------------------

def _round_up(x, m):
    return ((x + m - 1) // m) * m


def _round_down(x, m):
    return (x // m) * m


def _physical_vmem_bytes(default=64 << 20):
    """Physical VMEM of the running chip; conservative 64 MiB (v7x) fallback."""
    try:
        info = pltpu.get_tpu_info()
        for name in ("vmem_capacity_bytes", "vmem_bytes", "vmem_size_bytes"):
            val = getattr(info, name, None)
            if val:
                return int(val)
    except Exception:
        pass
    return int(default)


def _plan_tiles(B, sm, minor, C, NC, itemsize, batch_tile):
    """Pick the batch tile and an explicit vmem_limit_bytes.

    Accounts for: 2x double-buffered x tiles (padded to the dtype's
    (sublane, 128) layout), 2x output blocks, the f32 pooled accumulator,
    the VMEM-resident scaled weight + bias, and internal-scratch headroom.
    """
    phys = _physical_vmem_bytes()
    # 128 MiB parts (v5e/v6e) -> 96 MiB; 64 MiB parts (v7x) -> 48 MiB.
    base_limit = min((phys * 3) // 4, 96 << 20)

    sub = max(8, 32 // max(1, itemsize))                 # sublane multiple per dtype
    x_row = _round_up(sm, sub) * _round_up(minor, 128) * itemsize
    acc_row = _round_up(C, 128) * 4                      # f32 pooled accumulator
    out_row = _round_up(NC, 128) * 4                     # f32 output row
    per_tb = 2 * x_row + acc_row + 2 * out_row           # 2x buffered x and out

    fixed = (_round_up(C, 8) * _round_up(NC, 128) * 4    # resident W^T / S
             + 8 * 128 * 4                               # resident bias row
             + (2 << 20))                                # internal scratch headroom

    if batch_tile is None:
        tb = max(1, (base_limit - fixed) // per_tb)
    else:
        tb = max(1, int(batch_tile))

    if B > 8:
        # Guarantee >= 2 grid steps so the "parallel" batch axis can shard
        # across both TensorCores on v7x (harmless on single-TC parts).
        tb = min(tb, _round_up(pl.cdiv(B, 2), 8))

    if tb >= B:
        tb = B
    else:
        # Output block is (tb, NC): its second-to-last dim must be 8-aligned
        # unless it equals the full batch.
        tb = min(B, max(8, _round_down(tb, 8)))

    footprint = fixed + tb * per_tb
    vmem_limit = min(phys, max(base_limit, footprint + (2 << 20)))
    return int(tb), int(vmem_limit)


# ------------------------------- wrappers ------------------------------------

def _head_pallas_call(kernel, x3d, w_t, b_row, *, C, batch_tile):
    B, sm, minor = x3d.shape
    NC = w_t.shape[1]
    tb, vmem_limit = _plan_tiles(B, sm, minor, C, NC, x3d.dtype.itemsize,
                                 batch_tile)
    grid = (pl.cdiv(B, tb),)

    return pl.pallas_call(
        kernel,
        out_shape=jax.ShapeDtypeStruct((B, NC), jnp.float32),
        grid_spec=pltpu.PrefetchScalarGridSpec(
            num_scalar_prefetch=0,
            grid=grid,
            in_specs=[
                # Streamed batch tiles: auto double-buffered by BlockSpec.
                pl.BlockSpec((tb, sm, minor), lambda i: (i, 0, 0)),
                # Weight & bias: constant block index -> fetched once, resident.
                pl.BlockSpec((C, NC), lambda i: (0, 0)),
                pl.BlockSpec((1, NC), lambda i: (0, 0)),
            ],
            out_specs=pl.BlockSpec((tb, NC), lambda i: (i, 0)),
        ),
        compiler_params=pltpu.CompilerParams(
            # Batch tiles are independent -> shard across TCs on v7x megacore.
            dimension_semantics=("parallel",),
            vmem_limit_bytes=vmem_limit),
    )(x3d, w_t, b_row)


def _prep_params(w, b, S):
    NC, C = w.shape
    # Fold the 1/S pooling scale into the tiny weight once, at trace time.
    w_t = jnp.transpose(w, (1, 0)).astype(jnp.float32) * jnp.float32(1.0 / S)
    b_row = b.reshape(1, NC).astype(jnp.float32)
    return w_t, b_row, C, NC


def tumor_classifier_head_nhwc(x_nhwc, w, b, *, batch_tile=None):
    """Classifier head on channels-last backbone features (preferred layout).

    Args:
      x_nhwc: [B, H, W, C] float32 or bfloat16 feature maps (backbone output).
              Feed bf16 straight from the backbone when possible -- the kernel
              is HBM-bandwidth-bound, so halving x bytes is ~2x end-to-end.
              Do NOT cast in a wrapper (that would add an HBM round-trip).
      w:      [NC, C] float32  (PyTorch nn.Linear weight layout).
      b:      [NC]    float32  (PyTorch nn.Linear bias).
    Returns:
      [B, NC] float32 class probabilities (softmax over dim=1).
    """
    B, H, W, C = x_nhwc.shape
    S = H * W
    x_bsc = x_nhwc.reshape(B, S, C)                      # free reshape
    w_t, b_row, C, _ = _prep_params(w, b, S)
    return _head_pallas_call(_head_kernel_bsc, x_bsc, w_t, b_row,
                             C=C, batch_tile=batch_tile)


def tumor_classifier_forward(x_nchw, w, b, *, batch_tile=None):
    """PyTorch-layout [B, C, H, W] entry point (NCHW).

    Consumes NCHW directly: free reshape to [B, C, S] and an in-kernel
    last-axis reduce (XLU) -- no transpose round-trip through HBM.
    """
    B, C, H, W = x_nchw.shape
    S = H * W
    x_bcs = x_nchw.reshape(B, C, S)                      # free reshape
    w_t, b_row, C, _ = _prep_params(w, b, S)
    return _head_pallas_call(_head_kernel_bcs, x_bcs, w_t, b_row,
                             C=C, batch_tile=batch_tile)


# ------------------------------- reference ----------------------------------

def _reference_forward_nhwc(x_nhwc, w, b):
    pooled = jnp.mean(x_nhwc.astype(jnp.float32), axis=(1, 2))   # [B, C]
    logits = pooled @ w.T + b                                    # [B, NC]
    return jax.nn.softmax(logits, axis=1)


if __name__ == "__main__":
    key = jax.random.PRNGKey(0)
    k_x, k_w, k_b = jax.random.split(key, 3)

    # Small synthetic shapes: batch=2, num_features=32, spatial=16x16, classes=2
    B, C, H, W = 2, 32, 16, 16
    NUM_CLASSES = 2

    x_nhwc = jax.random.normal(k_x, (B, H, W, C), dtype=jnp.float32)
    w = jax.random.normal(k_w, (NUM_CLASSES, C), dtype=jnp.float32) * 0.1
    b = jax.random.normal(k_b, (NUM_CLASSES,), dtype=jnp.float32) * 0.1

    ref = jax.block_until_ready(_reference_forward_nhwc(x_nhwc, w, b))

    # 1) Channels-last (preferred) path, f32.
    out = jax.block_until_ready(tumor_classifier_head_nhwc(x_nhwc, w, b))
    assert out.shape == (B, NUM_CLASSES)
    assert jnp.allclose(out, ref, atol=1e-5, rtol=1e-5), "NHWC mismatch vs reference"
    assert jnp.allclose(jnp.sum(out, axis=1), 1.0, atol=1e-5), "softmax rows != 1"

    # 2) PyTorch NCHW layout path (in-kernel last-axis reduce, no transpose).
    x_nchw = jnp.transpose(x_nhwc, (0, 3, 1, 2))
    out2 = jax.block_until_ready(tumor_classifier_forward(x_nchw, w, b))
    assert jnp.allclose(out2, ref, atol=1e-5, rtol=1e-5), "NCHW path mismatch"

    # 3) bf16 activation stream (halved HBM bytes; f32 accumulation in-kernel).
    out_bf16 = jax.block_until_ready(
        tumor_classifier_head_nhwc(x_nhwc.astype(jnp.bfloat16), w, b))
    assert out_bf16.shape == (B, NUM_CLASSES)
    assert jnp.allclose(out_bf16, ref, atol=2e-2, rtol=2e-2), "bf16 path mismatch"

    print("KERNEL_OK")
</pallas_src>

<mosaic_0001>
module attributes {stable_mosaic.version = 11 : i64} {
  func.func @_head_kernel_bsc(%arg0: i32, %arg1: memref<2x256x32xf32, #tpu.memory_space<vmem>>, %arg2: memref<32x2xf32, #tpu.memory_space<vmem>>, %arg3: memref<1x2xf32, #tpu.memory_space<vmem>>, %arg4: memref<2x2xf32, #tpu.memory_space<vmem>>) attributes {dimension_semantics = [#tpu.dimension_semantics<parallel>], iteration_bounds = array<i64: 1>, scalar_prefetch = 0 : i64, scratch_operands = 0 : i64, tpu.core_type = #tpu.core_type<tc>, window_params = [{transform_indices = @transform_0, window_bounds = array<i64: 2, 256, 32>}, {pipeline_mode = #tpu.pipeline_mode<synchronous>, transform_indices = @transform_1, window_bounds = array<i64: 32, 2>}, {pipeline_mode = #tpu.pipeline_mode<synchronous>, transform_indices = @transform_2, window_bounds = array<i64: 1, 2>}, {transform_indices = @transform_3, window_bounds = array<i64: 2, 2>}]} {
    %c0 = arith.constant 0 : index
    %c0_0 = arith.constant 0 : index
    %c0_1 = arith.constant 0 : index
    %0 = vector.load %arg1[%c0, %c0_0, %c0_1] : memref<2x256x32xf32, #tpu.memory_space<vmem>>, vector<2x256x32xf32>
    %cst = arith.constant dense<0.000000e+00> : vector<2x32xf32>
    %1 = vector.multi_reduction <add>, %0, %cst [1] : vector<2x256x32xf32> to vector<2x32xf32>
    %c0_2 = arith.constant 0 : index
    %c0_3 = arith.constant 0 : index
    %2 = vector.load %arg2[%c0_2, %c0_3] : memref<32x2xf32, #tpu.memory_space<vmem>>, vector<32x2xf32>
    %cst_4 = arith.constant dense<0.000000e+00> : vector<2x2xf32>
    %3 = tpu.matmul %1, %2, %cst_4 {dimension_numbers = #tpu.dot_dimension_numbers<[1], [0], [0], [1], [0, 0, 1, 1], [], []>} : vector<2x32xf32>, vector<32x2xf32>, vector<2x2xf32> -> vector<2x2xf32>
    %c0_5 = arith.constant 0 : index
    %c0_6 = arith.constant 0 : index
    %4 = vector.load %arg3[%c0_5, %c0_6] : memref<1x2xf32, #tpu.memory_space<vmem>>, vector<1x2xf32>
    %5 = vector.broadcast %4 : vector<1x2xf32> to vector<2x2xf32>
    %6 = arith.addf %3, %5 : vector<2x2xf32>
    %cst_7 = arith.constant dense<0xFF800000> : vector<2xf32>
    %7 = vector.multi_reduction <maximumf>, %6, %cst_7 [1] : vector<2x2xf32> to vector<2xf32>
    %8 = vector.shape_cast %7 : vector<2xf32> to vector<2x1xf32>
    %9 = vector.broadcast %8 : vector<2x1xf32> to vector<2x2xf32>
    %10 = arith.subf %6, %9 : vector<2x2xf32>
    %11 = math.exp %10 : vector<2x2xf32>
    %cst_8 = arith.constant dense<0.000000e+00> : vector<2xf32>
    %12 = vector.multi_reduction <add>, %11, %cst_8 [1] : vector<2x2xf32> to vector<2xf32>
    %13 = vector.shape_cast %12 : vector<2xf32> to vector<2x1xf32>
    %14 = vector.broadcast %13 : vector<2x1xf32> to vector<2x2xf32>
    %15 = arith.divf %11, %14 : vector<2x2xf32>
    %c0_9 = arith.constant 0 : index
    %c0_10 = arith.constant 0 : index
    %16 = vector.load %arg4[%c0_9, %c0_10] : memref<2x2xf32, #tpu.memory_space<vmem>>, vector<2x2xf32>
    tpu.vector_store %arg4[%c0_9, %c0_10], %15 {strides = array<i32>} : memref<2x2xf32, #tpu.memory_space<vmem>>, vector<2x2xf32>,
    return
  }
  func.func @transform_0(%arg0: i32) -> (i32, i32, i32) {
    %c0_i32 = arith.constant 0 : i32
    %c0_i32_0 = arith.constant 0 : i32
    %c0_i32_1 = arith.constant 0 : i32
    return %arg0, %c0_i32, %c0_i32_0 : i32, i32, i32
  }
  func.func @transform_1(%arg0: i32) -> (i32, i32) {
    %c0_i32 = arith.constant 0 : i32
    %c0_i32_0 = arith.constant 0 : i32
    %c0_i32_1 = arith.constant 0 : i32
    return %c0_i32, %c0_i32_0 : i32, i32
  }
  func.func @transform_2(%arg0: i32) -> (i32, i32) {
    %c0_i32 = arith.constant 0 : i32
    %c0_i32_0 = arith.constant 0 : i32
    %c0_i32_1 = arith.constant 0 : i32
    return %c0_i32, %c0_i32_0 : i32, i32
  }
  func.func @transform_3(%arg0: i32) -> (i32, i32) {
    %c0_i32 = arith.constant 0 : i32
    %c0_i32_0 = arith.constant 0 : i32
    return %arg0, %c0_i32 : i32, i32
  }
}

</mosaic_0001>

<llo_original>
// kernel: tpu_custom_call.1
$region0: #{tpu_custom_call.1}
  #allocation0 [shape = 'u32[]', space=smem, size = 0x4, offset = 0x4, fixed_abs, tag = 'smem constant byte address 0x4 - core index']
  #allocation1 [shape = 'u32[72,128]{1,0:T(1,128)}', space=vmem, size = 0x9000, scoped, tag = 'internal scratch']
  %s0 = inlined_call_operand.vmem [shape: f32[2,256,32], index: 0, kind: input, shape index: {}]
  %s1 = inlined_call_operand.vmem [shape: f32[32,2], index: 1, kind: input, shape index: {}]
  %s2 = inlined_call_operand.vmem [shape: f32[1,2], index: 2, kind: input, shape index: {}]
  %s3 = inlined_call_operand.hbm [shape: f32[2,2], index: 3, kind: output, shape index: {}]
  %s4 = sld [smem:[#allocation0]]
  $region22: #{tpu_custom_call.1} parent=0
    _
  %s6 = ssub.s32 1, %s4
  %s7 = scalar_select 0, %s6, %s4
  $region1: #{tpu_custom_call.1} parent=0
    #allocation2 [shape = 'u8[1024]{0}', space=vmem, size = 0x400, scoped, tag = 'output window, operand 0, single buffered']
    #allocation3 [shape = 's32[1]{0}', space=sflag, size = 0x4, scoped, tag = 'scoped memory for tpu_custom_call.1']
    %8 = vsyncpa [#allocation3], 0
    // Predicated region
    $region2: #{tpu_custom_call.1} parent=1 // pred_check
      _
    $region3: #{tpu_custom_call.1} parent=1 // pred_check_branch
      %10 = sbr.rel (0) target = $region5
    $region4: #{tpu_custom_call.1} parent=1 // pred_region
      _
    $region5: #{tpu_custom_call.1} parent=1 // pred_fallthru
      _
    // Predicated region
    $region6: #{tpu_custom_call.1} parent=1 // pred_check
      _
    $region7: #{tpu_custom_call.1} parent=1 // pred_check_branch
      %12 = sbr.rel (0) target = $region9
    $region8: #{tpu_custom_call.1} parent=1 // pred_region
      _
    $region9: #{tpu_custom_call.1} parent=1 // pred_fallthru
      _
    // Predicated region
    $region10: #{tpu_custom_call.1} parent=1 // pred_check
      _
    $region11: #{tpu_custom_call.1} parent=1 // pred_check_branch
      %14 = sbr.rel (0) target = $region13
    $region12: #{tpu_custom_call.1} parent=1 // pred_region
      _
    $region13: #{tpu_custom_call.1} parent=1 // pred_fallthru
      _
    %v15 = vld [vmem:[%s0] sm:$0xff]
    %v16 = vld [vmem:[%s0 + $0x8] sm:$0xff]
    %v17 = vld [vmem:[%s0 + $0x10] sm:$0xff]
    %v18 = vld [vmem:[%s0 + $0x18] sm:$0xff]
    %v19 = vld [vmem:[%s0 + $0x20] sm:$0xff]
    %v20 = vld [vmem:[%s0 + $0x28] sm:$0xff]
    %v21 = vld [vmem:[%s0 + $0x30] sm:$0xff]
    %v22 = vld [vmem:[%s0 + $0x38] sm:$0xff]
    %v23 = vld [vmem:[%s0 + $0x40] sm:$0xff]
    %v24 = vld [vmem:[%s0 + $0x48] sm:$0xff]
    %v25 = vld [vmem:[%s0 + $0x50] sm:$0xff]
    %v26 = vld [vmem:[%s0 + $0x58] sm:$0xff]
    %v27 = vld [vmem:[%s0 + $0x60] sm:$0xff]
    %v28 = vld [vmem:[%s0 + $0x68] sm:$0xff]
    %v29 = vld [vmem:[%s0 + $0x70] sm:$0xff]
    %v30 = vld [vmem:[%s0 + $0x78] sm:$0xff]
    %v31 = vld [vmem:[%s0 + $0x80] sm:$0xff]
    %v32 = vld [vmem:[%s0 + $0x88] sm:$0xff]
    %v33 = vld [vmem:[%s0 + $0x90] sm:$0xff]
    %v34 = vld [vmem:[%s0 + $0x98] sm:$0xff]
    %v35 = vld [vmem:[%s0 + $0xa0] sm:$0xff]
    %v36 = vld [vmem:[%s0 + $0xa8] sm:$0xff]
    %v37 = vld [vmem:[%s0 + $0xb0] sm:$0xff]
    %v38 = vld [vmem:[%s0 + $0xb8] sm:$0xff]
    %v39 = vld [vmem:[%s0 + $0xc0] sm:$0xff]
    %v40 = vld [vmem:[%s0 + $0xc8] sm:$0xff]
    %v41 = vld [vmem:[%s0 + $0xd0] sm:$0xff]
    %v42 = vld [vmem:[%s0 + $0xd8] sm:$0xff]
    %v43 = vld [vmem:[%s0 + $0xe0] sm:$0xff]
    %v44 = vld [vmem:[%s0 + $0xe8] sm:$0xff]
    %v45 = vld [vmem:[%s0 + $0xf0] sm:$0xff]
    %v46 = vld [vmem:[%s0 + $0xf8] sm:$0xff]
    %v47 = vld [vmem:[%s0 + $0x100] sm:$0xff]
    %v48 = vld [vmem:[%s0 + $0x108] sm:$0xff]
    %v49 = vld [vmem:[%s0 + $0x110] sm:$0xff]
    %v50 = vld [vmem:[%s0 + $0x118] sm:$0xff]
    %v51 = vld [vmem:[%s0 + $0x120] sm:$0xff]
    %v52 = vld [vmem:[%s0 + $0x128] sm:$0xff]
    %v53 = vld [vmem:[%s0 + $0x130] sm:$0xff]
    %v54 = vld [vmem:[%s0 + $0x138] sm:$0xff]
    %v55 = vld [vmem:[%s0 + $0x140] sm:$0xff]
    %v56 = vld [vmem:[%s0 + $0x148] sm:$0xff]
    %v57 = vld [vmem:[%s0 + $0x150] sm:$0xff]
    %v58 = vld [vmem:[%s0 + $0x158] sm:$0xff]
    %v59 = vld [vmem:[%s0 + $0x160] sm:$0xff]
    %v60 = vld [vmem:[%s0 + $0x168] sm:$0xff]
    %v61 = vld [vmem:[%s0 + $0x170] sm:$0xff]
    %v62 = vld [vmem:[%s0 + $0x178] sm:$0xff]
    %v63 = vld [vmem:[%s0 + $0x180] sm:$0xff]
    %v64 = vld [vmem:[%s0 + $0x188] sm:$0xff]
    %v65 = vld [vmem:[%s0 + $0x190] sm:$0xff]
    %v66 = vld [vmem:[%s0 + $0x198] sm:$0xff]
    %v67 = vld [vmem:[%s0 + $0x1a0] sm:$0xff]
    %v68 = vld [vmem:[%s0 + $0x1a8] sm:$0xff]
    %v69 = vld [vmem:[%s0 + $0x1b0] sm:$0xff]
    %v70 = vld [vmem:[%s0 + $0x1b8] sm:$0xff]
    %v71 = vld [vmem:[%s0 + $0x1c0] sm:$0xff]
    %v72 = vld [vmem:[%s0 + $0x1c8] sm:$0xff]
    %v73 = vld [vmem:[%s0 + $0x1d0] sm:$0xff]
    %v74 = vld [vmem:[%s0 + $0x1d8] sm:$0xff]
    %v75 = vld [vmem:[%s0 + $0x1e0] sm:$0xff]
    %v76 = vld [vmem:[%s0 + $0x1e8] sm:$0xff]
    %v77 = vld [vmem:[%s0 + $0x1f0] sm:$0xff]
    %v78 = vld [vmem:[%s0 + $0x1f8] sm:$0xff]
    %vm79 = vcmask 261120
    %v80 = vsel %vm79, %v15, 0.0
    %v81 = vsel %vm79, %v16, 0.0
    %v82 = vadd.f32 %v80, %v81
    %v83 = vsel %vm79, %v17, 0.0
    %v84 = vadd.f32 %v82, %v83
    %v85 = vsel %vm79, %v18, 0.0
    %v86 = vadd.f32 %v84, %v85
    %v87 = vsel %vm79, %v19, 0.0
    %v88 = vadd.f32 %v86, %v87
    %v89 = vsel %vm79, %v20, 0.0
    %v90 = vadd.f32 %v88, %v89
    %v91 = vsel %vm79, %v21, 0.0
    %v92 = vadd.f32 %v90, %v91
    %v93 = vsel %vm79, %v22, 0.0
    %v94 = vadd.f32 %v92, %v93
    %v95 = vsel %vm79, %v23, 0.0
    %v96 = vadd.f32 %v94, %v95
    %v97 = vsel %vm79, %v24, 0.0
    %v98 = vadd.f32 %v96, %v97
    %v99 = vsel %vm79, %v25, 0.0
    %v100 = vadd.f32 %v98, %v99
    %v101 = vsel %vm79, %v26, 0.0
    %v102 = vadd.f32 %v100, %v101
    %v103 = vsel %vm79, %v27, 0.0
    %v104 = vadd.f32 %v102, %v103
    %v105 = vsel %vm79, %v28, 0.0
    %v106 = vadd.f32 %v104, %v105
    %v107 = vsel %vm79, %v29, 0.0
    %v108 = vadd.f32 %v106, %v107
    %v109 = vsel %vm79, %v30, 0.0
    %v110 = vadd.f32 %v108, %v109
    %v111 = vsel %vm79, %v31, 0.0
    %v112 = vadd.f32 %v110, %v111
    %v113 = vsel %vm79, %v32, 0.0
    %v114 = vadd.f32 %v112, %v113
    %v115 = vsel %vm79, %v33, 0.0
    %v116 = vadd.f32 %v114, %v115
    %v117 = vsel %vm79, %v34, 0.0
    %v118 = vadd.f32 %v116, %v117
    %v119 = vsel %vm79, %v35, 0.0
    %v120 = vadd.f32 %v118, %v119
    %v121 = vsel %vm79, %v36, 0.0
    %v122 = vadd.f32 %v120, %v121
    %v123 = vsel %vm79, %v37, 0.0
    %v124 = vadd.f32 %v122, %v123
    %v125 = vsel %vm79, %v38, 0.0
    %v126 = vadd.f32 %v124, %v125
    %v127 = vsel %vm79, %v39, 0.0
    %v128 = vadd.f32 %v126, %v127
    %v129 = vsel %vm79, %v40, 0.0
    %v130 = vadd.f32 %v128, %v129
    %v131 = vsel %vm79, %v41, 0.0
    %v132 = vadd.f32 %v130, %v131
    %v133 = vsel %vm79, %v42, 0.0
    %v134 = vadd.f32 %v132, %v133
    %v135 = vsel %vm79, %v43, 0.0
    %v136 = vadd.f32 %v134, %v135
    %v137 = vsel %vm79, %v44, 0.0
    %v138 = vadd.f32 %v136, %v137
    %v139 = vsel %vm79, %v45, 0.0
    %v140 = vadd.f32 %v138, %v139
    %v141 = vsel %vm79, %v46, 0.0
    %v142 = vadd.f32 %v140, %v141
    %v143 = vrot.slane %v142, 4
    %v144 = vadd.f32 %v142, %v143
    %v145 = vrot.slane %v144, 2
    %v146 = vadd.f32 %v144, %v145
    %v147 = vrot.slane %v146, 1
    %v148 = vadd.f32 %v146, %v147
    %v149 = vsel %vm79, %v47, 0.0
    %v150 = vsel %vm79, %v48, 0.0
    %v151 = vadd.f32 %v149, %v150
    %v152 = vsel %vm79, %v49, 0.0
    %v153 = vadd.f32 %v151, %v152
    %v154 = vsel %vm79, %v50, 0.0
    %v155 = vadd.f32 %v153, %v154
    %v156 = vsel %vm79, %v51, 0.0
    %v157 = vadd.f32 %v155, %v156
    %v158 = vsel %vm79, %v52, 0.0
    %v159 = vadd.f32 %v157, %v158
    %v160 = vsel %vm79, %v53, 0.0
    %v161 = vadd.f32 %v159, %v160
    %v162 = vsel %vm79, %v54, 0.0
    %v163 = vadd.f32 %v161, %v162
    %v164 = vsel %vm79, %v55, 0.0
    %v165 = vadd.f32 %v163, %v164
    %v166 = vsel %vm79, %v56, 0.0
    %v167 = vadd.f32 %v165, %v166
    %v168 = vsel %vm79, %v57, 0.0
    %v169 = vadd.f32 %v167, %v168
    %v170 = vsel %vm79, %v58, 0.0
    %v171 = vadd.f32 %v169, %v170
    %v172 = vsel %vm79, %v59, 0.0
    %v173 = vadd.f32 %v171, %v172
    %v174 = vsel %vm79, %v60, 0.0
    %v175 = vadd.f32 %v173, %v174
    %v176 = vsel %vm79, %v61, 0.0
    %v177 = vadd.f32 %v175, %v176
    %v178 = vsel %vm79, %v62, 0.0
    %v179 = vadd.f32 %v177, %v178
    %v180 = vsel %vm79, %v63, 0.0
    %v181 = vadd.f32 %v179, %v180
    %v182 = vsel %vm79, %v64, 0.0
    %v183 = vadd.f32 %v181, %v182
    %v184 = vsel %vm79, %v65, 0.0
    %v185 = vadd.f32 %v183, %v184
    %v186 = vsel %vm79, %v66, 0.0
    %v187 = vadd.f32 %v185, %v186
    %v188 = vsel %vm79, %v67, 0.0
    %v189 = vadd.f32 %v187, %v188
    %v190 = vsel %vm79, %v68, 0.0
    %v191 = vadd.f32 %v189, %v190
    %v192 = vsel %vm79, %v69, 0.0
    %v193 = vadd.f32 %v191, %v192
    %v194 = vsel %vm79, %v70, 0.0
    %v195 = vadd.f32 %v193, %v194
    %v196 = vsel %vm79, %v71, 0.0
    %v197 = vadd.f32 %v195, %v196
    %v198 = vsel %vm79, %v72, 0.0
    %v199 = vadd.f32 %v197, %v198
    %v200 = vsel %vm79, %v73, 0.0
    %v201 = vadd.f32 %v199, %v200
    %v202 = vsel %vm79, %v74, 0.0
    %v203 = vadd.f32 %v201, %v202
    %v204 = vsel %vm79, %v75, 0.0
    %v205 = vadd.f32 %v203, %v204
    %v206 = vsel %vm79, %v76, 0.0
    %v207 = vadd.f32 %v205, %v206
    %v208 = vsel %vm79, %v77, 0.0
    %v209 = vadd.f32 %v207, %v208
    %v210 = vsel %vm79, %v78, 0.0
    %v211 = vadd.f32 %v209, %v210
    %v212 = vrot.slane %v211, 4
    %v213 = vadd.f32 %v211, %v212
    %v214 = vrot.slane %v213, 2
    %v215 = vadd.f32 %v213, %v214
    %v216 = vrot.slane %v215, 1
    %v217 = vadd.f32 %v215, %v216
    %v218 = vld [vmem:[%s1] sm:$0xff]
    %v219 = vld [vmem:[%s1 + $0x8] sm:$0xff]
    %v220 = vld [vmem:[%s1 + $0x10] sm:$0xff]
    %v221 = vld [vmem:[%s1 + $0x18] sm:$0xff]
    %v222 = vld [vmem:[%s2] sm:$0x1]
    %v224 = vperm.slane %v222, 0
    %vm228 = vcmask 1041409
    %v229 = vsel %vm228, %v217, %v148
    %v230 = vsel %vm79, %v229, 0
    %232 = vmatpush.msra.mxu0 0.0
    %233 = vmatpush.msra.mxu0 0.0
    %234 = vmatpush.msra.mxu0 0.0
    %235 = vmatpush.msra.mxu0 0.0
    %236 = vmatpush.msra.mxu0 0.0
    %237 = vmatpush.msra.mxu0 0.0
    %238 = vmatpush.msra.mxu0 0.0
    %239 = vmatpush.msra.mxu0 0.0
    %240 = vmatpush.msra.mxu0 0.0
    %241 = vmatpush.msra.mxu0 0.0
    %242 = vmatpush.msra.mxu0 0.0
    %243 = vmatpush.msra.mxu0 0.0
    %244 = vmatpush.msra.mxu0 %v221
    %245 = vmatpush.msra.mxu0 %v220
    %246 = vmatpush.msra.mxu0 %v219
    %247 = vmatpush.msra.mxu0 %v218
    %248 = vmatmul.f32.gmra.mxu0 %v230
    %v249 = vpop.f32.mrf.mxu0
    %v250 = vadd.f32 %v224, %v249
    %251 = vdwg.mxu0
    %vm252 = vcmask 9216
    %v253 = vsel %vm252, %v250, -inf
    %254 = vmax.xlane.f32.xlu0 %v253
    %v255 = vpop.xlane.xlu0 %254
    %v256 = vsub.f32 %v250, %v255
    %v257 = vmul.f32 %v256, 1.442695
    %v258 = vpow.pop %v257
    %v259 = vsel %vm252, %v258, 0.0
    %260 = vadd.xlane.f32.xlu0 %v259
    %v261 = vpop.xlane.xlu0 %260
    %v262 = vrcp.pop %v261
    %v263 = vmul.f32 %v261, %v262
    %v264 = vsub.f32 1.0, %v263
    %v265 = vmul.f32 %v262, %v264
    %v266 = vadd.f32 %v262, %v265
    %vm267 = vweird.f32 %v261
    %vm268 = vweird.f32 %v262
    %vm269 = vmor %vm267, %vm268
    %v270 = vsel %vm269, %v262, %v266
    %v271 = vand.u32 2147483647, %v261
    %vm272 = vcmp.eq.f32.partialorder %v271, 8.507059e+37
    %v273 = vand.u32 %v261, 2147483648
    %v274 = vor.u32 1.1754944e-38, %v273
    %v275 = vsel %vm272, %v274, %v270
    %v276 = vmul.f32 %v258, %v275
    %277 = vst.msk [vmem:[#allocation2] sm:$0x3] %vm252, %v276
    // Predicated region
    $region14: #{tpu_custom_call.1} parent=1 // pred_check
      _
    $region15: #{tpu_custom_call.1} parent=1 // pred_check_branch
      %279 = sbr.rel (0) target = $region17
    $region16: #{tpu_custom_call.1} parent=1 // pred_region
      %281 = vsyncadd [#allocation3], 0
      %s283 = sshll.u32 [#allocation2], 4
      %s284 = int_to_ptr.vmem [resolvable:$true] %s283
      %s285 = sshll.u32 %s3, 4
      %s286 = int_to_ptr.hbm [resolvable:$true] %s285
      %288 = dma.vmem_to_hbm [thread:$0]  %s284, 32, %s286, [#allocation3]
    $region17: #{tpu_custom_call.1} parent=1 // pred_fallthru
      _
    // Predicated region
    $region18: #{tpu_custom_call.1} parent=1 // pred_check
      _
    $region19: #{tpu_custom_call.1} parent=1 // pred_check_branch
      %290 = sbr.rel (0) target = $region21
    $region20: #{tpu_custom_call.1} parent=1 // pred_region
      %292 = dma.done [#allocation3], 32
    $region21: #{tpu_custom_call.1} parent=1 // pred_fallthru
      _
    %293 = vsyncpa [#allocation3], 1

</llo_original>
